<compile_context>
chip_gen: v6e
topology: v6e:2x2x1
jax: 0.10.0
libtpu: 0.0.40
codegen_flags: <defaults>
</compile_context>

<pallas_src>
import numpy as np
import jax
import jax.numpy as jnp
from jax.experimental import pallas as pl
from jax.experimental.pallas import tpu as pltpu


def encoder_lstm_kernel(gate_in_ref, whh_ref, act_a_ref, act_b_ref,
                        o_ref, h_out_ref, c_out_ref):
    # gate_in_ref: (T*B, 4H) f32   pre-scaled input-gate preactivations (+bias)
    # whh_ref:     (H, 4H)   bf16  pre-scaled W_hh^T
    # act_a_ref:   (1, 4H)   f32   per-lane affine scale (0.5 on i/f/o, 1 on g)
    # act_b_ref:   (1, 4H)   f32   per-lane affine shift (0.5 on i/f/o, 0 on g)
    # o_ref:       (T, B, H) f32   per-step hidden states (seq-major)
    # h_out_ref / c_out_ref: (B, H) f32 final states
    T, B, H = o_ref.shape

    whh = whh_ref[...]                                   # hoisted (H, 4H) bf16
    a = act_a_ref[...]                                   # (1, 4H)
    b = act_b_ref[...]                                   # (1, 4H)

    h = jnp.zeros((B, H), jnp.float32)
    c = jnp.zeros((B, H), jnp.float32)

    # T is small and static: fully unrolled serial recurrence, h/c live in vregs.
    for t in range(T):
        # Recurrent contribution: bf16 operands -> single MXU pass, f32 accum.
        rec = jnp.dot(h.astype(jnp.bfloat16), whh,
                      preferred_element_type=jnp.float32)          # (B, 4H)
        gates = gate_in_ref[t * B:(t + 1) * B, :] + rec            # (B, 4H) f32

        # One EUP pass over the whole tile: sigmoid folded into tanh.
        #   sigmoid lanes (i,f,o): inputs were pre-scaled by 0.5, so
        #   act = 0.5*tanh(x/2) + 0.5 ; g lanes: act = tanh(x).
        act = jnp.tanh(gates) * a + b                              # (B, 4H)

        i_g = act[:, 0 * H:1 * H]
        f_g = act[:, 1 * H:2 * H]
        g_g = act[:, 2 * H:3 * H]
        o_g = act[:, 3 * H:4 * H]

        c = f_g * c + i_g * g_g
        h = o_g * jnp.tanh(c)

        o_ref[t] = h                                               # VMEM store only

    h_out_ref[...] = h
    c_out_ref[...] = c


def encoder_forward(x_seq, emb, w_ih, w_hh, b_ih, b_hh):
    """Pallas equivalent of Encoder.forward. Returns (o, h, c) with
    o: (B, T, H), h: (B, H), c: (B, H) — matching the PyTorch module."""
    T, B = x_seq.shape
    V, E = emb.shape
    H = w_hh.shape[1]
    G = 4 * H

    # Per-lane sigmoid->tanh folding constants (i, f, g, o gate order).
    lane = np.arange(G)
    is_g = (lane >= 2 * H) & (lane < 3 * H)
    pre_scale = jnp.asarray(np.where(is_g, 1.0, 0.5), jnp.float32)          # (4H,)
    act_a = jnp.asarray(np.where(is_g, 1.0, 0.5), jnp.float32).reshape(1, G)
    act_b = jnp.asarray(np.where(is_g, 0.0, 0.5), jnp.float32).reshape(1, G)

    # Hoisted, non-recurrent input projection (plain XLA, precision pinned):
    #   gate_in[t,b,:] = (emb[x[t,b]] @ W_ih^T + b_ih + b_hh) * pre_scale
    e_seq = emb.astype(jnp.float32)[x_seq.astype(jnp.int32)]                # (T, B, E)
    bias = (b_ih + b_hh).astype(jnp.float32)
    gate_in = (jnp.einsum('tbe,ge->tbg', e_seq, w_ih.astype(jnp.float32),
                          precision=jax.lax.Precision.HIGHEST) + bias) * pre_scale
    gate_in = gate_in.reshape(T * B, G)                                     # (T*B, 4H) f32

    # Recurrent weights: pre-scaled, transposed, explicitly bf16 for the MXU.
    whh_bf16 = (w_hh.astype(jnp.float32).T * pre_scale).astype(jnp.bfloat16)  # (H, 4H)

    vmem = pl.BlockSpec(memory_space=pltpu.MemorySpace.VMEM)

    o_tbh, h, c = pl.pallas_call(
        encoder_lstm_kernel,
        out_shape=(
            jax.ShapeDtypeStruct((T, B, H), jnp.float32),
            jax.ShapeDtypeStruct((B, H), jnp.float32),
            jax.ShapeDtypeStruct((B, H), jnp.float32),
        ),
        in_specs=[vmem, vmem, vmem, vmem],
        out_specs=(vmem, vmem, vmem),
    )(gate_in, whh_bf16, act_a, act_b)

    o = jnp.transpose(o_tbh, (1, 0, 2))                  # torch.stack(o, dim=1)
    return o, h, c


def encoder_reference(x_seq, emb, w_ih, w_hh, b_ih, b_hh):
    """Pure-JAX f32 reference matching nn.Embedding + nn.LSTMCell semantics."""
    T, B = x_seq.shape
    H = w_hh.shape[1]
    e_seq = emb[x_seq]                                   # (T, B, E)
    hp = jax.lax.Precision.HIGHEST

    def step(carry, e):
        h, c = carry
        gates = (jnp.dot(e, w_ih.T, precision=hp) + b_ih
                 + jnp.dot(h, w_hh.T, precision=hp) + b_hh)
        i, f, g, o = jnp.split(gates, 4, axis=-1)
        i = jax.nn.sigmoid(i)
        f = jax.nn.sigmoid(f)
        g = jnp.tanh(g)
        o = jax.nn.sigmoid(o)
        c = f * c + i * g
        h = o * jnp.tanh(c)
        return (h, c), h

    init = (jnp.zeros((B, H), jnp.float32), jnp.zeros((B, H), jnp.float32))
    (h, c), hs = jax.lax.scan(step, init, e_seq)
    return jnp.transpose(hs, (1, 0, 2)), h, c


if __name__ == "__main__":
    # Small, deterministic problem: vocab=30, d_embed=16, d_hidden=32, T=8, B=8.
    vocab_size, d_embed, d_hidden = 30, 16, 32
    T, B = 8, 8

    key = jax.random.PRNGKey(0)
    k_emb, k_wih, k_whh, k_bih, k_bhh, k_tok = jax.random.split(key, 6)

    # PyTorch-style init scale (uniform +/- 1/sqrt(H)) for the LSTMCell params.
    bound = 1.0 / np.sqrt(d_hidden)
    emb = jax.random.normal(k_emb, (vocab_size, d_embed), jnp.float32)
    w_ih = jax.random.uniform(k_wih, (4 * d_hidden, d_embed), jnp.float32,
                              -bound, bound)
    w_hh = jax.random.uniform(k_whh, (4 * d_hidden, d_hidden), jnp.float32,
                              -bound, bound)
    b_ih = jax.random.uniform(k_bih, (4 * d_hidden,), jnp.float32, -bound, bound)
    b_hh = jax.random.uniform(k_bhh, (4 * d_hidden,), jnp.float32, -bound, bound)

    x_seq = jax.random.randint(k_tok, (T, B), 0, vocab_size, jnp.int32)

    o, h, c = encoder_forward(x_seq, emb, w_ih, w_hh, b_ih, b_hh)
    jax.block_until_ready((o, h, c))

    o_ref, h_ref, c_ref = encoder_reference(x_seq, emb, w_ih, w_hh, b_ih, b_hh)
    # bf16 recurrent matmul => loosened tolerance vs the f32 reference.
    np.testing.assert_allclose(np.asarray(o), np.asarray(o_ref), rtol=2e-2, atol=2e-2)
    np.testing.assert_allclose(np.asarray(h), np.asarray(h_ref), rtol=2e-2, atol=2e-2)
    np.testing.assert_allclose(np.asarray(c), np.asarray(c_ref), rtol=2e-2, atol=2e-2)

    print("KERNEL_OK")
</pallas_src>

<mosaic_0001>
module attributes {stable_mosaic.version = 11 : i64} {
  func.func @encoder_lstm_kernel(%arg0: memref<64x128xf32, #tpu.memory_space<vmem>>, %arg1: memref<32x128xbf16, #tpu.memory_space<vmem>>, %arg2: memref<1x128xf32, #tpu.memory_space<vmem>>, %arg3: memref<1x128xf32, #tpu.memory_space<vmem>>, %arg4: memref<8x8x32xf32, #tpu.memory_space<vmem>>, %arg5: memref<8x32xf32, #tpu.memory_space<vmem>>, %arg6: memref<8x32xf32, #tpu.memory_space<vmem>>) attributes {dimension_semantics = [], scalar_prefetch = 0 : i64, scratch_operands = 0 : i64, tpu.core_type = #tpu.core_type<tc>} {
    %c0 = arith.constant 0 : index
    %c0_0 = arith.constant 0 : index
    %0 = vector.load %arg1[%c0, %c0_0] : memref<32x128xbf16, #tpu.memory_space<vmem>>, vector<32x128xbf16>
    %c0_1 = arith.constant 0 : index
    %c0_2 = arith.constant 0 : index
    %1 = vector.load %arg2[%c0_1, %c0_2] : memref<1x128xf32, #tpu.memory_space<vmem>>, vector<1x128xf32>
    %c0_3 = arith.constant 0 : index
    %c0_4 = arith.constant 0 : index
    %2 = vector.load %arg3[%c0_3, %c0_4] : memref<1x128xf32, #tpu.memory_space<vmem>>, vector<1x128xf32>
    %cst = arith.constant 0.000000e+00 : f32
    %3 = vector.broadcast %cst : f32 to vector<8x32xf32>
    %cst_5 = arith.constant 0.000000e+00 : f32
    %4 = vector.broadcast %cst_5 : f32 to vector<8x32xf32>
    %5 = arith.truncf %3 : vector<8x32xf32> to vector<8x32xbf16>
    %cst_6 = arith.constant dense<0.000000e+00> : vector<8x128xf32>
    %6 = tpu.matmul %5, %0, %cst_6 {dimension_numbers = #tpu.dot_dimension_numbers<[1], [0], [0], [1], [0, 0, 1, 1], [], []>} : vector<8x32xbf16>, vector<32x128xbf16>, vector<8x128xf32> -> vector<8x128xf32>
    %c0_7 = arith.constant 0 : index
    %c0_8 = arith.constant 0 : index
    %7 = vector.load %arg0[%c0_7, %c0_8] : memref<64x128xf32, #tpu.memory_space<vmem>>, vector<8x128xf32>
    %8 = arith.addf %7, %6 : vector<8x128xf32>
    %9 = math.tanh %8 : vector<8x128xf32>
    %10 = vector.broadcast %1 : vector<1x128xf32> to vector<8x128xf32>
    %11 = arith.mulf %9, %10 : vector<8x128xf32>
    %12 = vector.broadcast %2 : vector<1x128xf32> to vector<8x128xf32>
    %13 = arith.addf %11, %12 : vector<8x128xf32>
    %14 = vector.extract_strided_slice %13 {offsets = [0, 0], sizes = [8, 32], strides = [1, 1]} : vector<8x128xf32> to vector<8x32xf32>
    %15 = vector.extract_strided_slice %13 {offsets = [0, 32], sizes = [8, 32], strides = [1, 1]} : vector<8x128xf32> to vector<8x32xf32>
    %16 = vector.extract_strided_slice %13 {offsets = [0, 64], sizes = [8, 32], strides = [1, 1]} : vector<8x128xf32> to vector<8x32xf32>
    %17 = vector.extract_strided_slice %13 {offsets = [0, 96], sizes = [8, 32], strides = [1, 1]} : vector<8x128xf32> to vector<8x32xf32>
    %18 = arith.mulf %15, %4 : vector<8x32xf32>
    %19 = arith.mulf %14, %16 : vector<8x32xf32>
    %20 = arith.addf %18, %19 : vector<8x32xf32>
    %21 = math.tanh %20 : vector<8x32xf32>
    %22 = arith.mulf %17, %21 : vector<8x32xf32>
    %c0_9 = arith.constant 0 : index
    %c0_10 = arith.constant 0 : index
    %c0_11 = arith.constant 0 : index
    %23 = vector.load %arg4[%c0_9, %c0_10, %c0_11] : memref<8x8x32xf32, #tpu.memory_space<vmem>>, vector<1x8x32xf32>
    %24 = vector.shape_cast %23 : vector<1x8x32xf32> to vector<8x32xf32>
    %25 = vector.shape_cast %22 : vector<8x32xf32> to vector<1x8x32xf32>
    tpu.vector_store %arg4[%c0_9, %c0_10, %c0_11], %25 {strides = array<i32>} : memref<8x8x32xf32, #tpu.memory_space<vmem>>, vector<1x8x32xf32>,
    %26 = arith.truncf %22 : vector<8x32xf32> to vector<8x32xbf16>
    %cst_12 = arith.constant dense<0.000000e+00> : vector<8x128xf32>
    %27 = tpu.matmul %26, %0, %cst_12 {dimension_numbers = #tpu.dot_dimension_numbers<[1], [0], [0], [1], [0, 0, 1, 1], [], []>} : vector<8x32xbf16>, vector<32x128xbf16>, vector<8x128xf32> -> vector<8x128xf32>
    %c8 = arith.constant 8 : index
    %c0_13 = arith.constant 0 : index
    %28 = vector.load %arg0[%c8, %c0_13] : memref<64x128xf32, #tpu.memory_space<vmem>>, vector<8x128xf32>
    %29 = arith.addf %28, %27 : vector<8x128xf32>
    %30 = math.tanh %29 : vector<8x128xf32>
    %31 = vector.broadcast %1 : vector<1x128xf32> to vector<8x128xf32>
    %32 = arith.mulf %30, %31 : vector<8x128xf32>
    %33 = vector.broadcast %2 : vector<1x128xf32> to vector<8x128xf32>
    %34 = arith.addf %32, %33 : vector<8x128xf32>
    %35 = vector.extract_strided_slice %34 {offsets = [0, 0], sizes = [8, 32], strides = [1, 1]} : vector<8x128xf32> to vector<8x32xf32>
    %36 = vector.extract_strided_slice %34 {offsets = [0, 32], sizes = [8, 32], strides = [1, 1]} : vector<8x128xf32> to vector<8x32xf32>
    %37 = vector.extract_strided_slice %34 {offsets = [0, 64], sizes = [8, 32], strides = [1, 1]} : vector<8x128xf32> to vector<8x32xf32>
    %38 = vector.extract_strided_slice %34 {offsets = [0, 96], sizes = [8, 32], strides = [1, 1]} : vector<8x128xf32> to vector<8x32xf32>
    %39 = arith.mulf %36, %20 : vector<8x32xf32>
    %40 = arith.mulf %35, %37 : vector<8x32xf32>
    %41 = arith.addf %39, %40 : vector<8x32xf32>
    %42 = math.tanh %41 : vector<8x32xf32>
    %43 = arith.mulf %38, %42 : vector<8x32xf32>
    %c1 = arith.constant 1 : index
    %c0_14 = arith.constant 0 : index
    %c0_15 = arith.constant 0 : index
    %44 = vector.load %arg4[%c1, %c0_14, %c0_15] : memref<8x8x32xf32, #tpu.memory_space<vmem>>, vector<1x8x32xf32>
    %45 = vector.shape_cast %44 : vector<1x8x32xf32> to vector<8x32xf32>
    %46 = vector.shape_cast %43 : vector<8x32xf32> to vector<1x8x32xf32>
    tpu.vector_store %arg4[%c1, %c0_14, %c0_15], %46 {strides = array<i32>} : memref<8x8x32xf32, #tpu.memory_space<vmem>>, vector<1x8x32xf32>,
    %47 = arith.truncf %43 : vector<8x32xf32> to vector<8x32xbf16>
    %cst_16 = arith.constant dense<0.000000e+00> : vector<8x128xf32>
    %48 = tpu.matmul %47, %0, %cst_16 {dimension_numbers = #tpu.dot_dimension_numbers<[1], [0], [0], [1], [0, 0, 1, 1], [], []>} : vector<8x32xbf16>, vector<32x128xbf16>, vector<8x128xf32> -> vector<8x128xf32>
    %c16 = arith.constant 16 : index
    %c0_17 = arith.constant 0 : index
    %49 = vector.load %arg0[%c16, %c0_17] : memref<64x128xf32, #tpu.memory_space<vmem>>, vector<8x128xf32>
    %50 = arith.addf %49, %48 : vector<8x128xf32>
    %51 = math.tanh %50 : vector<8x128xf32>
    %52 = vector.broadcast %1 : vector<1x128xf32> to vector<8x128xf32>
    %53 = arith.mulf %51, %52 : vector<8x128xf32>
    %54 = vector.broadcast %2 : vector<1x128xf32> to vector<8x128xf32>
    %55 = arith.addf %53, %54 : vector<8x128xf32>
    %56 = vector.extract_strided_slice %55 {offsets = [0, 0], sizes = [8, 32], strides = [1, 1]} : vector<8x128xf32> to vector<8x32xf32>
    %57 = vector.extract_strided_slice %55 {offsets = [0, 32], sizes = [8, 32], strides = [1, 1]} : vector<8x128xf32> to vector<8x32xf32>
    %58 = vector.extract_strided_slice %55 {offsets = [0, 64], sizes = [8, 32], strides = [1, 1]} : vector<8x128xf32> to vector<8x32xf32>
    %59 = vector.extract_strided_slice %55 {offsets = [0, 96], sizes = [8, 32], strides = [1, 1]} : vector<8x128xf32> to vector<8x32xf32>
    %60 = arith.mulf %57, %41 : vector<8x32xf32>
    %61 = arith.mulf %56, %58 : vector<8x32xf32>
    %62 = arith.addf %60, %61 : vector<8x32xf32>
    %63 = math.tanh %62 : vector<8x32xf32>
    %64 = arith.mulf %59, %63 : vector<8x32xf32>
    %c2 = arith.constant 2 : index
    %c0_18 = arith.constant 0 : index
    %c0_19 = arith.constant 0 : index
    %65 = vector.load %arg4[%c2, %c0_18, %c0_19] : memref<8x8x32xf32, #tpu.memory_space<vmem>>, vector<1x8x32xf32>
    %66 = vector.shape_cast %65 : vector<1x8x32xf32> to vector<8x32xf32>
    %67 = vector.shape_cast %64 : vector<8x32xf32> to vector<1x8x32xf32>
    tpu.vector_store %arg4[%c2, %c0_18, %c0_19], %67 {strides = array<i32>} : memref<8x8x32xf32, #tpu.memory_space<vmem>>, vector<1x8x32xf32>,
    %68 = arith.truncf %64 : vector<8x32xf32> to vector<8x32xbf16>
    %cst_20 = arith.constant dense<0.000000e+00> : vector<8x128xf32>
    %69 = tpu.matmul %68, %0, %cst_20 {dimension_numbers = #tpu.dot_dimension_numbers<[1], [0], [0], [1], [0, 0, 1, 1], [], []>} : vector<8x32xbf16>, vector<32x128xbf16>, vector<8x128xf32> -> vector<8x128xf32>
    %c24 = arith.constant 24 : index
    %c0_21 = arith.constant 0 : index
    %70 = vector.load %arg0[%c24, %c0_21] : memref<64x128xf32, #tpu.memory_space<vmem>>, vector<8x128xf32>
    %71 = arith.addf %70, %69 : vector<8x128xf32>
    %72 = math.tanh %71 : vector<8x128xf32>
    %73 = vector.broadcast %1 : vector<1x128xf32> to vector<8x128xf32>
    %74 = arith.mulf %72, %73 : vector<8x128xf32>
    %75 = vector.broadcast %2 : vector<1x128xf32> to vector<8x128xf32>
    %76 = arith.addf %74, %75 : vector<8x128xf32>
    %77 = vector.extract_strided_slice %76 {offsets = [0, 0], sizes = [8, 32], strides = [1, 1]} : vector<8x128xf32> to vector<8x32xf32>
    %78 = vector.extract_strided_slice %76 {offsets = [0, 32], sizes = [8, 32], strides = [1, 1]} : vector<8x128xf32> to vector<8x32xf32>
    %79 = vector.extract_strided_slice %76 {offsets = [0, 64], sizes = [8, 32], strides = [1, 1]} : vector<8x128xf32> to vector<8x32xf32>
    %80 = vector.extract_strided_slice %76 {offsets = [0, 96], sizes = [8, 32], strides = [1, 1]} : vector<8x128xf32> to vector<8x32xf32>
    %81 = arith.mulf %78, %62 : vector<8x32xf32>
    %82 = arith.mulf %77, %79 : vector<8x32xf32>
    %83 = arith.addf %81, %82 : vector<8x32xf32>
    %84 = math.tanh %83 : vector<8x32xf32>
    %85 = arith.mulf %80, %84 : vector<8x32xf32>
    %c3 = arith.constant 3 : index
    %c0_22 = arith.constant 0 : index
    %c0_23 = arith.constant 0 : index
    %86 = vector.load %arg4[%c3, %c0_22, %c0_23] : memref<8x8x32xf32, #tpu.memory_space<vmem>>, vector<1x8x32xf32>
    %87 = vector.shape_cast %86 : vector<1x8x32xf32> to vector<8x32xf32>
    %88 = vector.shape_cast %85 : vector<8x32xf32> to vector<1x8x32xf32>
    tpu.vector_store %arg4[%c3, %c0_22, %c0_23], %88 {strides = array<i32>} : memref<8x8x32xf32, #tpu.memory_space<vmem>>, vector<1x8x32xf32>,
    %89 = arith.truncf %85 : vector<8x32xf32> to vector<8x32xbf16>
    %cst_24 = arith.constant dense<0.000000e+00> : vector<8x128xf32>
    %90 = tpu.matmul %89, %0, %cst_24 {dimension_numbers = #tpu.dot_dimension_numbers<[1], [0], [0], [1], [0, 0, 1, 1], [], []>} : vector<8x32xbf16>, vector<32x128xbf16>, vector<8x128xf32> -> vector<8x128xf32>
    %c32 = arith.constant 32 : index
    %c0_25 = arith.constant 0 : index
    %91 = vector.load %arg0[%c32, %c0_25] : memref<64x128xf32, #tpu.memory_space<vmem>>, vector<8x128xf32>
    %92 = arith.addf %91, %90 : vector<8x128xf32>
    %93 = math.tanh %92 : vector<8x128xf32>
    %94 = vector.broadcast %1 : vector<1x128xf32> to vector<8x128xf32>
    %95 = arith.mulf %93, %94 : vector<8x128xf32>
    %96 = vector.broadcast %2 : vector<1x128xf32> to vector<8x128xf32>
    %97 = arith.addf %95, %96 : vector<8x128xf32>
    %98 = vector.extract_strided_slice %97 {offsets = [0, 0], sizes = [8, 32], strides = [1, 1]} : vector<8x128xf32> to vector<8x32xf32>
    %99 = vector.extract_strided_slice %97 {offsets = [0, 32], sizes = [8, 32], strides = [1, 1]} : vector<8x128xf32> to vector<8x32xf32>
    %100 = vector.extract_strided_slice %97 {offsets = [0, 64], sizes = [8, 32], strides = [1, 1]} : vector<8x128xf32> to vector<8x32xf32>
    %101 = vector.extract_strided_slice %97 {offsets = [0, 96], sizes = [8, 32], strides = [1, 1]} : vector<8x128xf32> to vector<8x32xf32>
    %102 = arith.mulf %99, %83 : vector<8x32xf32>
    %103 = arith.mulf %98, %100 : vector<8x32xf32>
    %104 = arith.addf %102, %103 : vector<8x32xf32>
    %105 = math.tanh %104 : vector<8x32xf32>
    %106 = arith.mulf %101, %105 : vector<8x32xf32>
    %c4 = arith.constant 4 : index
    %c0_26 = arith.constant 0 : index
    %c0_27 = arith.constant 0 : index
    %107 = vector.load %arg4[%c4, %c0_26, %c0_27] : memref<8x8x32xf32, #tpu.memory_space<vmem>>, vector<1x8x32xf32>
    %108 = vector.shape_cast %107 : vector<1x8x32xf32> to vector<8x32xf32>
    %109 = vector.shape_cast %106 : vector<8x32xf32> to vector<1x8x32xf32>
    tpu.vector_store %arg4[%c4, %c0_26, %c0_27], %109 {strides = array<i32>} : memref<8x8x32xf32, #tpu.memory_space<vmem>>, vector<1x8x32xf32>,
    %110 = arith.truncf %106 : vector<8x32xf32> to vector<8x32xbf16>
    %cst_28 = arith.constant dense<0.000000e+00> : vector<8x128xf32>
    %111 = tpu.matmul %110, %0, %cst_28 {dimension_numbers = #tpu.dot_dimension_numbers<[1], [0], [0], [1], [0, 0, 1, 1], [], []>} : vector<8x32xbf16>, vector<32x128xbf16>, vector<8x128xf32> -> vector<8x128xf32>
    %c40 = arith.constant 40 : index
    %c0_29 = arith.constant 0 : index
    %112 = vector.load %arg0[%c40, %c0_29] : memref<64x128xf32, #tpu.memory_space<vmem>>, vector<8x128xf32>
    %113 = arith.addf %112, %111 : vector<8x128xf32>
    %114 = math.tanh %113 : vector<8x128xf32>
    %115 = vector.broadcast %1 : vector<1x128xf32> to vector<8x128xf32>
    %116 = arith.mulf %114, %115 : vector<8x128xf32>
    %117 = vector.broadcast %2 : vector<1x128xf32> to vector<8x128xf32>
    %118 = arith.addf %116, %117 : vector<8x128xf32>
    %119 = vector.extract_strided_slice %118 {offsets = [0, 0], sizes = [8, 32], strides = [1, 1]} : vector<8x128xf32> to vector<8x32xf32>
    %120 = vector.extract_strided_slice %118 {offsets = [0, 32], sizes = [8, 32], strides = [1, 1]} : vector<8x128xf32> to vector<8x32xf32>
    %121 = vector.extract_strided_slice %118 {offsets = [0, 64], sizes = [8, 32], strides = [1, 1]} : vector<8x128xf32> to vector<8x32xf32>
    %122 = vector.extract_strided_slice %118 {offsets = [0, 96], sizes = [8, 32], strides = [1, 1]} : vector<8x128xf32> to vector<8x32xf32>
    %123 = arith.mulf %120, %104 : vector<8x32xf32>
    %124 = arith.mulf %119, %121 : vector<8x32xf32>
    %125 = arith.addf %123, %124 : vector<8x32xf32>
    %126 = math.tanh %125 : vector<8x32xf32>
    %127 = arith.mulf %122, %126 : vector<8x32xf32>
    %c5 = arith.constant 5 : index
    %c0_30 = arith.constant 0 : index
    %c0_31 = arith.constant 0 : index
    %128 = vector.load %arg4[%c5, %c0_30, %c0_31] : memref<8x8x32xf32, #tpu.memory_space<vmem>>, vector<1x8x32xf32>
    %129 = vector.shape_cast %128 : vector<1x8x32xf32> to vector<8x32xf32>
    %130 = vector.shape_cast %127 : vector<8x32xf32> to vector<1x8x32xf32>
    tpu.vector_store %arg4[%c5, %c0_30, %c0_31], %130 {strides = array<i32>} : memref<8x8x32xf32, #tpu.memory_space<vmem>>, vector<1x8x32xf32>,
    %131 = arith.truncf %127 : vector<8x32xf32> to vector<8x32xbf16>
    %cst_32 = arith.constant dense<0.000000e+00> : vector<8x128xf32>
    %132 = tpu.matmul %131, %0, %cst_32 {dimension_numbers = #tpu.dot_dimension_numbers<[1], [0], [0], [1], [0, 0, 1, 1], [], []>} : vector<8x32xbf16>, vector<32x128xbf16>, vector<8x128xf32> -> vector<8x128xf32>
    %c48 = arith.constant 48 : index
    %c0_33 = arith.constant 0 : index
    %133 = vector.load %arg0[%c48, %c0_33] : memref<64x128xf32, #tpu.memory_space<vmem>>, vector<8x128xf32>
    %134 = arith.addf %133, %132 : vector<8x128xf32>
    %135 = math.tanh %134 : vector<8x128xf32>
    %136 = vector.broadcast %1 : vector<1x128xf32> to vector<8x128xf32>
    %137 = arith.mulf %135, %136 : vector<8x128xf32>
    %138 = vector.broadcast %2 : vector<1x128xf32> to vector<8x128xf32>
    %139 = arith.addf %137, %138 : vector<8x128xf32>
    %140 = vector.extract_strided_slice %139 {offsets = [0, 0], sizes = [8, 32], strides = [1, 1]} : vector<8x128xf32> to vector<8x32xf32>
    %141 = vector.extract_strided_slice %139 {offsets = [0, 32], sizes = [8, 32], strides = [1, 1]} : vector<8x128xf32> to vector<8x32xf32>
    %142 = vector.extract_strided_slice %139 {offsets = [0, 64], sizes = [8, 32], strides = [1, 1]} : vector<8x128xf32> to vector<8x32xf32>
    %143 = vector.extract_strided_slice %139 {offsets = [0, 96], sizes = [8, 32], strides = [1, 1]} : vector<8x128xf32> to vector<8x32xf32>
    %144 = arith.mulf %141, %125 : vector<8x32xf32>
    %145 = arith.mulf %140, %142 : vector<8x32xf32>
    %146 = arith.addf %144, %145 : vector<8x32xf32>
    %147 = math.tanh %146 : vector<8x32xf32>
    %148 = arith.mulf %143, %147 : vector<8x32xf32>
    %c6 = arith.constant 6 : index
    %c0_34 = arith.constant 0 : index
    %c0_35 = arith.constant 0 : index
    %149 = vector.load %arg4[%c6, %c0_34, %c0_35] : memref<8x8x32xf32, #tpu.memory_space<vmem>>, vector<1x8x32xf32>
    %150 = vector.shape_cast %149 : vector<1x8x32xf32> to vector<8x32xf32>
    %151 = vector.shape_cast %148 : vector<8x32xf32> to vector<1x8x32xf32>
    tpu.vector_store %arg4[%c6, %c0_34, %c0_35], %151 {strides = array<i32>} : memref<8x8x32xf32, #tpu.memory_space<vmem>>, vector<1x8x32xf32>,
    %152 = arith.truncf %148 : vector<8x32xf32> to vector<8x32xbf16>
    %cst_36 = arith.constant dense<0.000000e+00> : vector<8x128xf32>
    %153 = tpu.matmul %152, %0, %cst_36 {dimension_numbers = #tpu.dot_dimension_numbers<[1], [0], [0], [1], [0, 0, 1, 1], [], []>} : vector<8x32xbf16>, vector<32x128xbf16>, vector<8x128xf32> -> vector<8x128xf32>
    %c56 = arith.constant 56 : index
    %c0_37 = arith.constant 0 : index
    %154 = vector.load %arg0[%c56, %c0_37] : memref<64x128xf32, #tpu.memory_space<vmem>>, vector<8x128xf32>
    %155 = arith.addf %154, %153 : vector<8x128xf32>
    %156 = math.tanh %155 : vector<8x128xf32>
    %157 = vector.broadcast %1 : vector<1x128xf32> to vector<8x128xf32>
    %158 = arith.mulf %156, %157 : vector<8x128xf32>
    %159 = vector.broadcast %2 : vector<1x128xf32> to vector<8x128xf32>
    %160 = arith.addf %158, %159 : vector<8x128xf32>
    %161 = vector.extract_strided_slice %160 {offsets = [0, 0], sizes = [8, 32], strides = [1, 1]} : vector<8x128xf32> to vector<8x32xf32>
    %162 = vector.extract_strided_slice %160 {offsets = [0, 32], sizes = [8, 32], strides = [1, 1]} : vector<8x128xf32> to vector<8x32xf32>
    %163 = vector.extract_strided_slice %160 {offsets = [0, 64], sizes = [8, 32], strides = [1, 1]} : vector<8x128xf32> to vector<8x32xf32>
    %164 = vector.extract_strided_slice %160 {offsets = [0, 96], sizes = [8, 32], strides = [1, 1]} : vector<8x128xf32> to vector<8x32xf32>
    %165 = arith.mulf %162, %146 : vector<8x32xf32>
    %166 = arith.mulf %161, %163 : vector<8x32xf32>
    %167 = arith.addf %165, %166 : vector<8x32xf32>
    %168 = math.tanh %167 : vector<8x32xf32>
    %169 = arith.mulf %164, %168 : vector<8x32xf32>
    %c7 = arith.constant 7 : index
    %c0_38 = arith.constant 0 : index
    %c0_39 = arith.constant 0 : index
    %170 = vector.load %arg4[%c7, %c0_38, %c0_39] : memref<8x8x32xf32, #tpu.memory_space<vmem>>, vector<1x8x32xf32>
    %171 = vector.shape_cast %170 : vector<1x8x32xf32> to vector<8x32xf32>
    %172 = vector.shape_cast %169 : vector<8x32xf32> to vector<1x8x32xf32>
    tpu.vector_store %arg4[%c7, %c0_38, %c0_39], %172 {strides = array<i32>} : memref<8x8x32xf32, #tpu.memory_space<vmem>>, vector<1x8x32xf32>,
    %c0_40 = arith.constant 0 : index
    %c0_41 = arith.constant 0 : index
    %173 = vector.load %arg5[%c0_40, %c0_41] : memref<8x32xf32, #tpu.memory_space<vmem>>, vector<8x32xf32>
    tpu.vector_store %arg5[%c0_40, %c0_41], %169 {strides = array<i32>} : memref<8x32xf32, #tpu.memory_space<vmem>>, vector<8x32xf32>,
    %c0_42 = arith.constant 0 : index
    %c0_43 = arith.constant 0 : index
    %174 = vector.load %arg6[%c0_42, %c0_43] : memref<8x32xf32, #tpu.memory_space<vmem>>, vector<8x32xf32>
    tpu.vector_store %arg6[%c0_42, %c0_43], %167 {strides = array<i32>} : memref<8x32xf32, #tpu.memory_space<vmem>>, vector<8x32xf32>,
    return
  }
}

</mosaic_0001>

<llo_original>
// kernel: tpu_custom_call.1
$region0: #{tpu_custom_call.1}
  #allocation0 [shape = 'u32[]', space=smem, size = 0x4, offset = 0x4, fixed_abs, tag = 'smem constant byte address 0x4 - core index']
  #allocation1 [shape = 'u32[144,128]{1,0:T(1,128)}', space=vmem, size = 0x12000, scoped, tag = 'internal scratch']
  %s0 = inlined_call_operand.hbm [shape: f32[64,128], index: 0, kind: input, shape index: {}]
  %s1 = inlined_call_operand.hbm [shape: bf16[32,128], index: 1, kind: input, shape index: {}]
  %s2 = inlined_call_operand.vmem [shape: f32[1,128], index: 2, kind: input, shape index: {}]
  %s3 = inlined_call_operand.vmem [shape: f32[1,128], index: 3, kind: input, shape index: {}]
  %s4 = inlined_call_operand.hbm [shape: f32[8,8,32], index: 4, kind: output, shape index: {0}]
  %s5 = inlined_call_operand.hbm [shape: f32[8,32], index: 5, kind: output, shape index: {1}]
  %s6 = inlined_call_operand.hbm [shape: f32[8,32], index: 6, kind: output, shape index: {2}]
  %7 = xla_tuple %s4, %s5, %s6
  %s8 = sld [smem:[#allocation0]]
  $region50: #{tpu_custom_call.1} parent=0
    _
  %s10 = ssub.s32 1, %s8
  %s11 = scalar_select 0, %s10, %s8
  $region1: #{tpu_custom_call.1} parent=0
    #allocation2 [shape = 'u8[32768]{0}', space=vmem, size = 0x8000, scoped, tag = 'input window, operand 0, single buffered']
    #allocation3 [shape = 's32[1]{0}', space=sflag, size = 0x4, scoped, tag = 'scoped memory for tpu_custom_call.1']
    #allocation4 [shape = 's32[1]{0}', space=sflag, size = 0x4, scoped, tag = 'scoped memory for tpu_custom_call.1']
    #allocation5 [shape = 'u8[8192]{0}', space=vmem, size = 0x2000, scoped, tag = 'input window, operand 1, single buffered']
    #allocation6 [shape = 's32[1]{0}', space=sflag, size = 0x4, scoped, tag = 'scoped memory for tpu_custom_call.1']
    #allocation7 [shape = 'u8[32768]{0}', space=vmem, size = 0x8000, scoped, tag = 'output window, operand 0, single buffered']
    #allocation8 [shape = 'u8[4096]{0}', space=vmem, size = 0x1000, scoped, tag = 'output window, operand 1, single buffered']
    #allocation9 [shape = 's32[1]{0}', space=sflag, size = 0x4, scoped, tag = 'scoped memory for tpu_custom_call.1']
    #allocation10 [shape = 'u8[4096]{0}', space=vmem, size = 0x1000, scoped, tag = 'output window, operand 2, single buffered']
    %12 = vsyncpa [#allocation3], 0
    %13 = vsyncpa [#allocation6], 0
    %14 = vsyncpa [#allocation4], 0
    %15 = vsyncpa [#allocation9], 0
    // Predicated region
    $region2: #{tpu_custom_call.1} parent=1 // pred_check
      _
    $region3: #{tpu_custom_call.1} parent=1 // pred_check_branch
      %17 = sbr.rel (0) target = $region5
    $region4: #{tpu_custom_call.1} parent=1 // pred_region
      %s19 = ssub.s32 1024, 1024
      %20 = vsyncadd [#allocation3], %s19
      %s21 = sshll.u32 [#allocation2], 4
      %s22 = int_to_ptr.vmem [resolvable:$true] %s21
      %27 = dma.hbm_to_vmem [thread:$0]  %s0, 1024, %s22, [#allocation3], 128, 128, 8
    $region5: #{tpu_custom_call.1} parent=1 // pred_fallthru
      _
    // Predicated region
    $region6: #{tpu_custom_call.1} parent=1 // pred_check
      _
    $region7: #{tpu_custom_call.1} parent=1 // pred_check_branch
      %29 = sbr.rel (0) target = $region9
    $region8: #{tpu_custom_call.1} parent=1 // pred_region
      %s31 = ssub.s32 256, 256
      %32 = vsyncadd [#allocation6], %s31
      %s33 = sshll.u32 [#allocation5], 4
      %s34 = int_to_ptr.vmem [resolvable:$true] %s33
      %39 = dma.hbm_to_vmem [thread:$0]  %s1, 256, %s34, [#allocation6], 64, 64, 4
    $region9: #{tpu_custom_call.1} parent=1 // pred_fallthru
      _
    // Predicated region
    $region10: #{tpu_custom_call.1} parent=1 // pred_check
      _
    $region11: #{tpu_custom_call.1} parent=1 // pred_check_branch
      %41 = sbr.rel (0) target = $region13
    $region12: #{tpu_custom_call.1} parent=1 // pred_region
      _
    $region13: #{tpu_custom_call.1} parent=1 // pred_fallthru
      _
    // Predicated region
    $region14: #{tpu_custom_call.1} parent=1 // pred_check
      _
    $region15: #{tpu_custom_call.1} parent=1 // pred_check_branch
      %43 = sbr.rel (0) target = $region17
    $region16: #{tpu_custom_call.1} parent=1 // pred_region
      _
    $region17: #{tpu_custom_call.1} parent=1 // pred_fallthru
      _
    // Predicated region
    $region18: #{tpu_custom_call.1} parent=1 // pred_check
      _
    $region19: #{tpu_custom_call.1} parent=1 // pred_check_branch
      %45 = sbr.rel (0) target = $region21
    $region20: #{tpu_custom_call.1} parent=1 // pred_region
      %46 = dma.done [#allocation3], 1024
    $region21: #{tpu_custom_call.1} parent=1 // pred_fallthru
      _
    // Predicated region
    $region22: #{tpu_custom_call.1} parent=1 // pred_check
      _
    $region23: #{tpu_custom_call.1} parent=1 // pred_check_branch
      %48 = sbr.rel (0) target = $region25
    $region24: #{tpu_custom_call.1} parent=1 // pred_region
      %49 = dma.done [#allocation6], 256
    $region25: #{tpu_custom_call.1} parent=1 // pred_fallthru
      _
    %v51 = vld [vmem:[#allocation5] sm:$0xf]
    %v52 = vld [vmem:[#allocation5 + $0x4] sm:$0xf]
    %v53 = vld [vmem:[#allocation5 + $0x8] sm:$0xf]
    %v54 = vld [vmem:[#allocation5 + $0xc] sm:$0xf]
    %v55 = vld [vmem:[%s2] sm:$0x1]
    %v56 = vld [vmem:[%s3] sm:$0x1]
    %v61 = vunpack.c.l.b16 %v51
    %v62 = vunpack.c.l.b16 %v52
    %v63 = vunpack.c.l.b16 %v53
    %v64 = vunpack.c.l.b16 %v54
    %v65 = vpack.c.b16 %v62, %v61
    %v66 = vpack.c.b16 %v64, %v63
    %vm69 = vcmask 261120
    %v71 = vsel %vm69, 0, 0
    %73 = vmatprep.subr.bf16.mxu0 0
    %74 = vmatpush1.bf16.msra.mxu0 0
    %75 = vmatprep.subr.bf16.mxu0 0
    %76 = vmatpush1.bf16.msra.mxu0 0
    %77 = vmatprep.subr.bf16.mxu0 0
    %78 = vmatpush1.bf16.msra.mxu0 0
    %79 = vmatprep.subr.bf16.mxu0 0
    %80 = vmatpush1.bf16.msra.mxu0 0
    %81 = vmatprep.subr.bf16.mxu0 0
    %82 = vmatpush1.bf16.msra.mxu0 0
    %83 = vmatprep.subr.bf16.mxu0 0
    %84 = vmatpush1.bf16.msra.mxu0 0
    %85 = vmatprep.subr.bf16.mxu0 0
    %86 = vmatpush1.bf16.msra.mxu0 %v66
    %87 = vmatprep.subr.bf16.mxu0 0
    %88 = vmatpush1.bf16.msra.mxu0 %v65
    %89 = vmatprep.subr.bf16.mxu0 0
    %90 = vmatpush2.bf16.msra.mxu0 0
    %91 = vmatprep.subr.bf16.mxu0 0
    %92 = vmatpush2.bf16.msra.mxu0 0
    %93 = vmatprep.subr.bf16.mxu0 0
    %94 = vmatpush2.bf16.msra.mxu0 0
    %95 = vmatprep.subr.bf16.mxu0 0
    %96 = vmatpush2.bf16.msra.mxu0 0
    %97 = vmatprep.subr.bf16.mxu0 0
    %98 = vmatpush2.bf16.msra.mxu0 0
    %99 = vmatprep.subr.bf16.mxu0 0
    %100 = vmatpush2.bf16.msra.mxu0 0
    %101 = vmatprep.subr.bf16.mxu0 0
    %102 = vmatpush2.bf16.msra.mxu0 0
    %103 = vmatprep.subr.bf16.mxu0 0
    %104 = vmatpush2.bf16.msra.mxu0 0
    %105 = vmatprep.mubr.bf16.mxu0 0
    %106 = vmatmul.mubr.bf16.gmra.mxu0 %v71
    %v107 = vpop.f32.mrf.mxu0
    %v108 = vadd.f32 0.0, %v107
    %v109 = vpop.f32.mrf.mxu0
    %v110 = vpop.f32.mrf.mxu0
    %v111 = vpop.f32.mrf.mxu0
    %112 = vdwg.mxu0
    %v113 = vld [vmem:[#allocation2] sm:$0xff]
    %v114 = vadd.f32 %v113, %v108
    %v115 = vtanh.pop %v114
    %v117 = vlaneseq
    %v118 = vshrl.u32 %v117, 7
    %v119 = vsub.s32 0, %v118
    %v120 = vrot.slane %v55, %v119
    %v122 = vmul.f32 %v115, %v120
    %v124 = vlaneseq
    %v125 = vshrl.u32 %v124, 7
    %v126 = vsub.s32 0, %v125
    %v127 = vrot.slane %v56, %v126
    %v129 = vadd.f32 %v122, %v127
    %v130 = vmul.f32 %v129, 0.0
    %132 = vrot.lane.b32.xlu0 %v129, 64
    %v133 = vpop.permute.xlu0 %132
    %v135 = vmul.f32 %v129, %v133
    %137 = vrot.lane.b32.xlu0 %v135, 32
    %v138 = vpop.permute.xlu0 %137
    %v140 = vadd.f32 %v130, %v138
    %v141 = vtanh.pop %v140
    %143 = vrot.lane.b32.xlu0 %v141, 64
    %v144 = vpop.permute.xlu0 %143
    %v146 = vmul.f32 %v129, %v144
    %148 = vrot.lane.b32.xlu0 %v146, 32
    %v149 = vpop.permute.xlu0 %148
    %151 = vst.msk [vmem:[#allocation7] sm:$0xff] %vm69, %v149
    %v152 = vpack.c.bf16 %v146, %v146
    %154 = vrot.lane.b32.xlu0 %v152, 32
    %v155 = vpop.permute.xlu0 %154
    %v157 = vsel %vm69, %v155, 0
    %159 = vmatprep.subr.bf16.mxu0 0
    %160 = vmatpush1.bf16.msra.mxu0 0
    %161 = vmatprep.subr.bf16.mxu0 0
    %162 = vmatpush1.bf16.msra.mxu0 0
    %163 = vmatprep.subr.bf16.mxu0 0
    %164 = vmatpush1.bf16.msra.mxu0 0
    %165 = vmatprep.subr.bf16.mxu0 0
    %166 = vmatpush1.bf16.msra.mxu0 0
    %167 = vmatprep.subr.bf16.mxu0 0
    %168 = vmatpush1.bf16.msra.mxu0 0
    %169 = vmatprep.subr.bf16.mxu0 0
    %170 = vmatpush1.bf16.msra.mxu0 0
    %171 = vmatprep.subr.bf16.mxu0 0
    %172 = vmatpush1.bf16.msra.mxu0 %v66
    %173 = vmatprep.subr.bf16.mxu0 0
    %174 = vmatpush1.bf16.msra.mxu0 %v65
    %175 = vmatprep.subr.bf16.mxu0 0
    %176 = vmatpush2.bf16.msra.mxu0 0
    %177 = vmatprep.subr.bf16.mxu0 0
    %178 = vmatpush2.bf16.msra.mxu0 0
    %179 = vmatprep.subr.bf16.mxu0 0
    %180 = vmatpush2.bf16.msra.mxu0 0
    %181 = vmatprep.subr.bf16.mxu0 0
    %182 = vmatpush2.bf16.msra.mxu0 0
    %183 = vmatprep.subr.bf16.mxu0 0
    %184 = vmatpush2.bf16.msra.mxu0 0
    %185 = vmatprep.subr.bf16.mxu0 0
    %186 = vmatpush2.bf16.msra.mxu0 0
    %187 = vmatprep.subr.bf16.mxu0 0
    %188 = vmatpush2.bf16.msra.mxu0 0
    %189 = vmatprep.subr.bf16.mxu0 0
    %190 = vmatpush2.bf16.msra.mxu0 0
    %191 = vmatprep.mubr.bf16.mxu0 0
    %192 = vmatmul.mubr.bf16.gmra.mxu0 %v157
    %v193 = vpop.f32.mrf.mxu0
    %v194 = vadd.f32 0.0, %v193
    %v195 = vpop.f32.mrf.mxu0
    %v196 = vpop.f32.mrf.mxu0
    %v197 = vpop.f32.mrf.mxu0
    %198 = vdwg.mxu0
    %v199 = vld [vmem:[#allocation2 + $0x8] sm:$0xff]
    %v200 = vadd.f32 %v199, %v194
    %v201 = vtanh.pop %v200
    %v202 = vmul.f32 %v201, %v120
    %v203 = vadd.f32 %v202, %v127
    %v204 = vmul.f32 %v203, %v140
    %206 = vrot.lane.b32.xlu0 %v203, 64
    %v207 = vpop.permute.xlu0 %206
    %v209 = vmul.f32 %v203, %v207
    %211 = vrot.lane.b32.xlu0 %v209, 32
    %v212 = vpop.permute.xlu0 %211
    %v214 = vadd.f32 %v204, %v212
    %v215 = vtanh.pop %v214
    %217 = vrot.lane.b32.xlu0 %v215, 64
    %v218 = vpop.permute.xlu0 %217
    %v220 = vmul.f32 %v203, %v218
    %222 = vrot.lane.b32.xlu0 %v220, 32
    %v223 = vpop.permute.xlu0 %222
    %s225 = scalar_lea.vmem [#allocation7], 8
    %226 = vst.msk [vmem:[%s225] sm:$0xff] %vm69, %v223
    %v227 = vpack.c.bf16 %v220, %v220
    %229 = vrot.lane.b32.xlu0 %v227, 32
    %v230 = vpop.permute.xlu0 %229
    %v232 = vsel %vm69, %v230, 0
    %234 = vmatprep.subr.bf16.mxu0 0
    %235 = vmatpush1.bf16.msra.mxu0 0
    %236 = vmatprep.subr.bf16.mxu0 0
    %237 = vmatpush1.bf16.msra.mxu0 0
    %238 = vmatprep.subr.bf16.mxu0 0
    %239 = vmatpush1.bf16.msra.mxu0 0
    %240 = vmatprep.subr.bf16.mxu0 0
    %241 = vmatpush1.bf16.msra.mxu0 0
    %242 = vmatprep.subr.bf16.mxu0 0
    %243 = vmatpush1.bf16.msra.mxu0 0
    %244 = vmatprep.subr.bf16.mxu0 0
    %245 = vmatpush1.bf16.msra.mxu0 0
    %246 = vmatprep.subr.bf16.mxu0 0
    %247 = vmatpush1.bf16.msra.mxu0 %v66
    %248 = vmatprep.subr.bf16.mxu0 0
    %249 = vmatpush1.bf16.msra.mxu0 %v65
    %250 = vmatprep.subr.bf16.mxu0 0
    %251 = vmatpush2.bf16.msra.mxu0 0
    %252 = vmatprep.subr.bf16.mxu0 0
    %253 = vmatpush2.bf16.msra.mxu0 0
    %254 = vmatprep.subr.bf16.mxu0 0
    %255 = vmatpush2.bf16.msra.mxu0 0
    %256 = vmatprep.subr.bf16.mxu0 0
    %257 = vmatpush2.bf16.msra.mxu0 0
    %258 = vmatprep.subr.bf16.mxu0 0
    %259 = vmatpush2.bf16.msra.mxu0 0
    %260 = vmatprep.subr.bf16.mxu0 0
    %261 = vmatpush2.bf16.msra.mxu0 0
    %262 = vmatprep.subr.bf16.mxu0 0
    %263 = vmatpush2.bf16.msra.mxu0 0
    %264 = vmatprep.subr.bf16.mxu0 0
    %265 = vmatpush2.bf16.msra.mxu0 0
    %266 = vmatprep.mubr.bf16.mxu0 0
    %267 = vmatmul.mubr.bf16.gmra.mxu0 %v232
    %v268 = vpop.f32.mrf.mxu0
    %v269 = vadd.f32 0.0, %v268
    %v270 = vpop.f32.mrf.mxu0
    %v271 = vpop.f32.mrf.mxu0
    %v272 = vpop.f32.mrf.mxu0
    %273 = vdwg.mxu0
    %v274 = vld [vmem:[#allocation2 + $0x10] sm:$0xff]
    %v275 = vadd.f32 %v274, %v269
    %v276 = vtanh.pop %v275
    %v277 = vmul.f32 %v276, %v120
    %v278 = vadd.f32 %v277, %v127
    %v279 = vmul.f32 %v278, %v214
    %281 = vrot.lane.b32.xlu0 %v278, 64
    %v282 = vpop.permute.xlu0 %281
    %v284 = vmul.f32 %v278, %v282
    %286 = vrot.lane.b32.xlu0 %v284, 32
    %v287 = vpop.permute.xlu0 %286
    %v289 = vadd.f32 %v279, %v287
    %v290 = vtanh.pop %v289
    %292 = vrot.lane.b32.xlu0 %v290, 64
    %v293 = vpop.permute.xlu0 %292
    %v295 = vmul.f32 %v278, %v293
    %297 = vrot.lane.b32.xlu0 %v295, 32
    %v298 = vpop.permute.xlu0 %297
    %s300 = scalar_lea.vmem [#allocation7], 16
    %301 = vst.msk [vmem:[%s300] sm:$0xff] %vm69, %v298
    %v302 = vpack.c.bf16 %v295, %v295
    %304 = vrot.lane.b32.xlu0 %v302, 32
    %v305 = vpop.permute.xlu0 %304
    %v307 = vsel %vm69, %v305, 0
    %309 = vmatprep.subr.bf16.mxu0 0
    %310 = vmatpush1.bf16.msra.mxu0 0
    %311 = vmatprep.subr.bf16.mxu0 0
    %312 = vmatpush1.bf16.msra.mxu0 0
    %313 = vmatprep.subr.bf16.mxu0 0
    %314 = vmatpush1.bf16.msra.mxu0 0
    %315 = vmatprep.subr.bf16.mxu0 0
    %316 = vmatpush1.bf16.msra.mxu0 0
    %317 = vmatprep.subr.bf16.mxu0 0
    %318 = vmatpush1.bf16.msra.mxu0 0
    %319 = vmatprep.subr.bf16.mxu0 0
    %320 = vmatpush1.bf16.msra.mxu0 0
    %321 = vmatprep.subr.bf16.mxu0 0
    %322 = vmatpush1.bf16.msra.mxu0 %v66
    %323 = vmatprep.subr.bf16.mxu0 0
    %324 = vmatpush1.bf16.msra.mxu0 %v65
    %325 = vmatprep.subr.bf16.mxu0 0
    %326 = vmatpush2.bf16.msra.mxu0 0
    %327 = vmatprep.subr.bf16.mxu0 0
    %328 = vmatpush2.bf16.msra.mxu0 0
    %329 = vmatprep.subr.bf16.mxu0 0
    %330 = vmatpush2.bf16.msra.mxu0 0
    %331 = vmatprep.subr.bf16.mxu0 0
    %332 = vmatpush2.bf16.msra.mxu0 0
    %333 = vmatprep.subr.bf16.mxu0 0
    %334 = vmatpush2.bf16.msra.mxu0 0
    %335 = vmatprep.subr.bf16.mxu0 0
    %336 = vmatpush2.bf16.msra.mxu0 0
    %337 = vmatprep.subr.bf16.mxu0 0
    %338 = vmatpush2.bf16.msra.mxu0 0
    %339 = vmatprep.subr.bf16.mxu0 0
    %340 = vmatpush2.bf16.msra.mxu0 0
    %341 = vmatprep.mubr.bf16.mxu0 0
    %342 = vmatmul.mubr.bf16.gmra.mxu0 %v307
    %v343 = vpop.f32.mrf.mxu0
    %v344 = vadd.f32 0.0, %v343
    %v345 = vpop.f32.mrf.mxu0
    %v346 = vpop.f32.mrf.mxu0
    %v347 = vpop.f32.mrf.mxu0
    %348 = vdwg.mxu0
    %v349 = vld [vmem:[#allocation2 + $0x18] sm:$0xff]
    %v350 = vadd.f32 %v349, %v344
    %v351 = vtanh.pop %v350
    %v352 = vmul.f32 %v351, %v120
    %v353 = vadd.f32 %v352, %v127
    %v354 = vmul.f32 %v353, %v289
    %356 = vrot.lane.b32.xlu0 %v353, 64
    %v357 = vpop.permute.xlu0 %356
    %v359 = vmul.f32 %v353, %v357
    %361 = vrot.lane.b32.xlu0 %v359, 32
    %v362 = vpop.permute.xlu0 %361
    %v364 = vadd.f32 %v354, %v362
    %v365 = vtanh.pop %v364
    %367 = vrot.lane.b32.xlu0 %v365, 64
    %v368 = vpop.permute.xlu0 %367
    %v370 = vmul.f32 %v353, %v368
    %372 = vrot.lane.b32.xlu0 %v370, 32
    %v373 = vpop.permute.xlu0 %372
    %s375 = scalar_lea.vmem [#allocation7], 24
    %376 = vst.msk [vmem:[%s375] sm:$0xff] %vm69, %v373
    %v377 = vpack.c.bf16 %v370, %v370
    %379 = vrot.lane.b32.xlu0 %v377, 32
    %v380 = vpop.permute.xlu0 %379
    %v382 = vsel %vm69, %v380, 0
    %384 = vmatprep.subr.bf16.mxu0 0
    %385 = vmatpush1.bf16.msra.mxu0 0
    %386 = vmatprep.subr.bf16.mxu0 0
    %387 = vmatpush1.bf16.msra.mxu0 0
    %388 = vmatprep.subr.bf16.mxu0 0
    %389 = vmatpush1.bf16.msra.mxu0 0
    %390 = vmatprep.subr.bf16.mxu0 0
    %391 = vmatpush1.bf16.msra.mxu0 0
    %392 = vmatprep.subr.bf16.mxu0 0
    %393 = vmatpush1.bf16.msra.mxu0 0
    %394 = vmatprep.subr.bf16.mxu0 0
    %395 = vmatpush1.bf16.msra.mxu0 0
    %396 = vmatprep.subr.bf16.mxu0 0
    %397 = vmatpush1.bf16.msra.mxu0 %v66
    %398 = vmatprep.subr.bf16.mxu0 0
    %399 = vmatpush1.bf16.msra.mxu0 %v65
    %400 = vmatprep.subr.bf16.mxu0 0
    %401 = vmatpush2.bf16.msra.mxu0 0
    %402 = vmatprep.subr.bf16.mxu0 0
    %403 = vmatpush2.bf16.msra.mxu0 0
    %404 = vmatprep.subr.bf16.mxu0 0
    %405 = vmatpush2.bf16.msra.mxu0 0
    %406 = vmatprep.subr.bf16.mxu0 0
    %407 = vmatpush2.bf16.msra.mxu0 0
    %408 = vmatprep.subr.bf16.mxu0 0
    %409 = vmatpush2.bf16.msra.mxu0 0
    %410 = vmatprep.subr.bf16.mxu0 0
    %411 = vmatpush2.bf16.msra.mxu0 0
    %412 = vmatprep.subr.bf16.mxu0 0
    %413 = vmatpush2.bf16.msra.mxu0 0
    %414 = vmatprep.subr.bf16.mxu0 0
    %415 = vmatpush2.bf16.msra.mxu0 0
    %416 = vmatprep.mubr.bf16.mxu0 0
    %417 = vmatmul.mubr.bf16.gmra.mxu0 %v382
    %v418 = vpop.f32.mrf.mxu0
    %v419 = vadd.f32 0.0, %v418
    %v420 = vpop.f32.mrf.mxu0
    %v421 = vpop.f32.mrf.mxu0
    %v422 = vpop.f32.mrf.mxu0
    %423 = vdwg.mxu0
    %v424 = vld [vmem:[#allocation2 + $0x20] sm:$0xff]
    %v425 = vadd.f32 %v424, %v419
    %v426 = vtanh.pop %v425
    %v427 = vmul.f32 %v426, %v120
    %v428 = vadd.f32 %v427, %v127
    %v429 = vmul.f32 %v428, %v364
    %431 = vrot.lane.b32.xlu0 %v428, 64
    %v432 = vpop.permute.xlu0 %431
    %v434 = vmul.f32 %v428, %v432
    %436 = vrot.lane.b32.xlu0 %v434, 32
    %v437 = vpop.permute.xlu0 %436
    %v439 = vadd.f32 %v429, %v437
    %v440 = vtanh.pop %v439
    %442 = vrot.lane.b32.xlu0 %v440, 64
    %v443 = vpop.permute.xlu0 %442
    %v445 = vmul.f32 %v428, %v443
    %447 = vrot.lane.b32.xlu0 %v445, 32
    %v448 = vpop.permute.xlu0 %447
    %s450 = scalar_lea.vmem [#allocation7], 32
    %451 = vst.msk [vmem:[%s450] sm:$0xff] %vm69, %v448
    %v452 = vpack.c.bf16 %v445, %v445
    %454 = vrot.lane.b32.xlu0 %v452, 32
    %v455 = vpop.permute.xlu0 %454
    %v457 = vsel %vm69, %v455, 0
    %459 = vmatprep.subr.bf16.mxu0 0
    %460 = vmatpush1.bf16.msra.mxu0 0
    %461 = vmatprep.subr.bf16.mxu0 0
    %462 = vmatpush1.bf16.msra.mxu0 0
    %463 = vmatprep.subr.bf16.mxu0 0
    %464 = vmatpush1.bf16.msra.mxu0 0
    %465 = vmatprep.subr.bf16.mxu0 0
    %466 = vmatpush1.bf16.msra.mxu0 0
    %467 = vmatprep.subr.bf16.mxu0 0
    %468 = vmatpush1.bf16.msra.mxu0 0
    %469 = vmatprep.subr.bf16.mxu0 0
    %470 = vmatpush1.bf16.msra.mxu0 0
    %471 = vmatprep.subr.bf16.mxu0 0
    %472 = vmatpush1.bf16.msra.mxu0 %v66
    %473 = vmatprep.subr.bf16.mxu0 0
    %474 = vmatpush1.bf16.msra.mxu0 %v65
    %475 = vmatprep.subr.bf16.mxu0 0
    %476 = vmatpush2.bf16.msra.mxu0 0
    %477 = vmatprep.subr.bf16.mxu0 0
    %478 = vmatpush2.bf16.msra.mxu0 0
    %479 = vmatprep.subr.bf16.mxu0 0
    %480 = vmatpush2.bf16.msra.mxu0 0
    %481 = vmatprep.subr.bf16.mxu0 0
    %482 = vmatpush2.bf16.msra.mxu0 0
    %483 = vmatprep.subr.bf16.mxu0 0
    %484 = vmatpush2.bf16.msra.mxu0 0
    %485 = vmatprep.subr.bf16.mxu0 0
    %486 = vmatpush2.bf16.msra.mxu0 0
    %487 = vmatprep.subr.bf16.mxu0 0
    %488 = vmatpush2.bf16.msra.mxu0 0
    %489 = vmatprep.subr.bf16.mxu0 0
    %490 = vmatpush2.bf16.msra.mxu0 0
    %491 = vmatprep.mubr.bf16.mxu0 0
    %492 = vmatmul.mubr.bf16.gmra.mxu0 %v457
    %v493 = vpop.f32.mrf.mxu0
    %v494 = vadd.f32 0.0, %v493
    %v495 = vpop.f32.mrf.mxu0
    %v496 = vpop.f32.mrf.mxu0
    %v497 = vpop.f32.mrf.mxu0
    %498 = vdwg.mxu0
    %v499 = vld [vmem:[#allocation2 + $0x28] sm:$0xff]
    %v500 = vadd.f32 %v499, %v494
    %v501 = vtanh.pop %v500
    %v502 = vmul.f32 %v501, %v120
    %v503 = vadd.f32 %v502, %v127
    %v504 = vmul.f32 %v503, %v439
    %506 = vrot.lane.b32.xlu0 %v503, 64
    %v507 = vpop.permute.xlu0 %506
    %v509 = vmul.f32 %v503, %v507
    %511 = vrot.lane.b32.xlu0 %v509, 32
    %v512 = vpop.permute.xlu0 %511
    %v514 = vadd.f32 %v504, %v512
    %v515 = vtanh.pop %v514
    %517 = vrot.lane.b32.xlu0 %v515, 64
    %v518 = vpop.permute.xlu0 %517
    %v520 = vmul.f32 %v503, %v518
    %522 = vrot.lane.b32.xlu0 %v520, 32
    %v523 = vpop.permute.xlu0 %522
    %s525 = scalar_lea.vmem [#allocation7], 40
    %526 = vst.msk [vmem:[%s525] sm:$0xff] %vm69, %v523
    %v527 = vpack.c.bf16 %v520, %v520
    %529 = vrot.lane.b32.xlu0 %v527, 32
    %v530 = vpop.permute.xlu0 %529
    %v532 = vsel %vm69, %v530, 0
    %534 = vmatprep.subr.bf16.mxu0 0
    %535 = vmatpush1.bf16.msra.mxu0 0
    %536 = vmatprep.subr.bf16.mxu0 0
    %537 = vmatpush1.bf16.msra.mxu0 0
    %538 = vmatprep.subr.bf16.mxu0 0
    %539 = vmatpush1.bf16.msra.mxu0 0
    %540 = vmatprep.subr.bf16.mxu0 0
    %541 = vmatpush1.bf16.msra.mxu0 0
    %542 = vmatprep.subr.bf16.mxu0 0
    %543 = vmatpush1.bf16.msra.mxu0 0
    %544 = vmatprep.subr.bf16.mxu0 0
    %545 = vmatpush1.bf16.msra.mxu0 0
    %546 = vmatprep.subr.bf16.mxu0 0
    %547 = vmatpush1.bf16.msra.mxu0 %v66
    %548 = vmatprep.subr.bf16.mxu0 0
    %549 = vmatpush1.bf16.msra.mxu0 %v65
    %550 = vmatprep.subr.bf16.mxu0 0
    %551 = vmatpush2.bf16.msra.mxu0 0
    %552 = vmatprep.subr.bf16.mxu0 0
    %553 = vmatpush2.bf16.msra.mxu0 0
    %554 = vmatprep.subr.bf16.mxu0 0
    %555 = vmatpush2.bf16.msra.mxu0 0
    %556 = vmatprep.subr.bf16.mxu0 0
    %557 = vmatpush2.bf16.msra.mxu0 0
    %558 = vmatprep.subr.bf16.mxu0 0
    %559 = vmatpush2.bf16.msra.mxu0 0
    %560 = vmatprep.subr.bf16.mxu0 0
    %561 = vmatpush2.bf16.msra.mxu0 0
    %562 = vmatprep.subr.bf16.mxu0 0
    %563 = vmatpush2.bf16.msra.mxu0 0
    %564 = vmatprep.subr.bf16.mxu0 0
    %565 = vmatpush2.bf16.msra.mxu0 0
    %566 = vmatprep.mubr.bf16.mxu0 0
    %567 = vmatmul.mubr.bf16.gmra.mxu0 %v532
    %v568 = vpop.f32.mrf.mxu0
    %v569 = vadd.f32 0.0, %v568
    %v570 = vpop.f32.mrf.mxu0
    %v571 = vpop.f32.mrf.mxu0
    %v572 = vpop.f32.mrf.mxu0
    %573 = vdwg.mxu0
    %v574 = vld [vmem:[#allocation2 + $0x30] sm:$0xff]
    %v575 = vadd.f32 %v574, %v569
    %v576 = vtanh.pop %v575
    %v577 = vmul.f32 %v576, %v120
    %v578 = vadd.f32 %v577, %v127
    %v579 = vmul.f32 %v578, %v514
    %581 = vrot.lane.b32.xlu0 %v578, 64
    %v582 = vpop.permute.xlu0 %581
    %v584 = vmul.f32 %v578, %v582
    %586 = vrot.lane.b32.xlu0 %v584, 32
    %v587 = vpop.permute.xlu0 %586
    %v589 = vadd.f32 %v579, %v587
    %v590 = vtanh.pop %v589
    %592 = vrot.lane.b32.xlu0 %v590, 64
    %v593 = vpop.permute.xlu0 %592
    %v595 = vmul.f32 %v578, %v593
    %597 = vrot.lane.b32.xlu0 %v595, 32
    %v598 = vpop.permute.xlu0 %597
    %s600 = scalar_lea.vmem [#allocation7], 48
    %601 = vst.msk [vmem:[%s600] sm:$0xff] %vm69, %v598
    %v602 = vpack.c.bf16 %v595, %v595
    %604 = vrot.lane.b32.xlu0 %v602, 32
    %v605 = vpop.permute.xlu0 %604
    %v607 = vsel %vm69, %v605, 0
    %609 = vmatprep.subr.bf16.mxu0 0
    %610 = vmatpush1.bf16.msra.mxu0 0
    %611 = vmatprep.subr.bf16.mxu0 0
    %612 = vmatpush1.bf16.msra.mxu0 0
    %613 = vmatprep.subr.bf16.mxu0 0
    %614 = vmatpush1.bf16.msra.mxu0 0
    %615 = vmatprep.subr.bf16.mxu0 0
    %616 = vmatpush1.bf16.msra.mxu0 0
    %617 = vmatprep.subr.bf16.mxu0 0
    %618 = vmatpush1.bf16.msra.mxu0 0
    %619 = vmatprep.subr.bf16.mxu0 0
    %620 = vmatpush1.bf16.msra.mxu0 0
    %621 = vmatprep.subr.bf16.mxu0 0
    %622 = vmatpush1.bf16.msra.mxu0 %v66
    %623 = vmatprep.subr.bf16.mxu0 0
    %624 = vmatpush1.bf16.msra.mxu0 %v65
    %625 = vmatprep.subr.bf16.mxu0 0
    %626 = vmatpush2.bf16.msra.mxu0 0
    %627 = vmatprep.subr.bf16.mxu0 0
    %628 = vmatpush2.bf16.msra.mxu0 0
    %629 = vmatprep.subr.bf16.mxu0 0
    %630 = vmatpush2.bf16.msra.mxu0 0
    %631 = vmatprep.subr.bf16.mxu0 0
    %632 = vmatpush2.bf16.msra.mxu0 0
    %633 = vmatprep.subr.bf16.mxu0 0
    %634 = vmatpush2.bf16.msra.mxu0 0
    %635 = vmatprep.subr.bf16.mxu0 0
    %636 = vmatpush2.bf16.msra.mxu0 0
    %637 = vmatprep.subr.bf16.mxu0 0
    %638 = vmatpush2.bf16.msra.mxu0 0
    %639 = vmatprep.subr.bf16.mxu0 0
    %640 = vmatpush2.bf16.msra.mxu0 0
    %641 = vmatprep.mubr.bf16.mxu0 0
    %642 = vmatmul.mubr.bf16.gmra.mxu0 %v607
    %v643 = vpop.f32.mrf.mxu0
    %v644 = vadd.f32 0.0, %v643
    %v645 = vpop.f32.mrf.mxu0
    %v646 = vpop.f32.mrf.mxu0
    %v647 = vpop.f32.mrf.mxu0
    %648 = vdwg.mxu0
    %v649 = vld [vmem:[#allocation2 + $0x38] sm:$0xff]
    %v650 = vadd.f32 %v649, %v644
    %v651 = vtanh.pop %v650
    %v652 = vmul.f32 %v651, %v120
    %v653 = vadd.f32 %v652, %v127
    %v654 = vmul.f32 %v653, %v589
    %656 = vrot.lane.b32.xlu0 %v653, 64
    %v657 = vpop.permute.xlu0 %656
    %v659 = vmul.f32 %v653, %v657
    %661 = vrot.lane.b32.xlu0 %v659, 32
    %v662 = vpop.permute.xlu0 %661
    %v664 = vadd.f32 %v654, %v662
    %v665 = vtanh.pop %v664
    %667 = vrot.lane.b32.xlu0 %v665, 64
    %v668 = vpop.permute.xlu0 %667
    %v670 = vmul.f32 %v653, %v668
    %672 = vrot.lane.b32.xlu0 %v670, 32
    %v673 = vpop.permute.xlu0 %672
    %s675 = scalar_lea.vmem [#allocation7], 56
    %676 = vst.msk [vmem:[%s675] sm:$0xff] %vm69, %v673
    %677 = vst.msk [vmem:[#allocation8] sm:$0xff] %vm69, %v673
    %679 = vrot.lane.b32.xlu0 %v664, 96
    %v680 = vpop.permute.xlu0 %679
    %682 = vst.msk [vmem:[#allocation10] sm:$0xff] %vm69, %v680
    // Predicated region
    $region26: #{tpu_custom_call.1} parent=1 // pred_check
      _
    $region27: #{tpu_custom_call.1} parent=1 // pred_check_branch
      %684 = sbr.rel (0) target = $region29
    $region28: #{tpu_custom_call.1} parent=1 // pred_region
      %s686 = ssub.s32 1024, 1024
      %687 = vsyncadd [#allocation4], %s686
      %s688 = sshll.u32 [#allocation7], 4
      %s689 = int_to_ptr.vmem [resolvable:$true] %s688
      %694 = dma.vmem_to_hbm [thread:$0]  %s689, 1024, %s4, [#allocation4], 128, 128, 8
    $region29: #{tpu_custom_call.1} parent=1 // pred_fallthru
      _
    // Predicated region
    $region30: #{tpu_custom_call.1} parent=1 // pred_check
      _
    $region31: #{tpu_custom_call.1} parent=1 // pred_check_branch
      %696 = sbr.rel (0) target = $region33
    $region32: #{tpu_custom_call.1} parent=1 // pred_region
      %s698 = ssub.s32 128, 128
      %699 = vsyncadd [#allocation9], %s698
      %s701 = sshll.u32 [#allocation8], 4
      %s702 = int_to_ptr.vmem [resolvable:$true] %s701
      %704 = dma.vmem_to_hbm [thread:$0]  %s702, 128, %s5, [#allocation9]
    $region33: #{tpu_custom_call.1} parent=1 // pred_fallthru
      _
    // Predicated region
    $region34: #{tpu_custom_call.1} parent=1 // pred_check
      _
    $region35: #{tpu_custom_call.1} parent=1 // pred_check_branch
      %706 = sbr.rel (0) target = $region37
    $region36: #{tpu_custom_call.1} parent=1 // pred_region
      %s708 = ssub.s32 128, 128
      %709 = vsyncadd [#allocation9], %s708
      %s711 = sshll.u32 [#allocation10], 4
      %s712 = int_to_ptr.vmem [resolvable:$true] %s711
      %714 = dma.vmem_to_hbm [thread:$0]  %s712, 128, %s6, [#allocation9]
    $region37: #{tpu_custom_call.1} parent=1 // pred_fallthru
      _
    // Predicated region
    $region38: #{tpu_custom_call.1} parent=1 // pred_check
      _
    $region39: #{tpu_custom_call.1} parent=1 // pred_check_branch
      %716 = sbr.rel (0) target = $region41
    $region40: #{tpu_custom_call.1} parent=1 // pred_region
      %717 = dma.done [#allocation4], 1024
    $region41: #{tpu_custom_call.1} parent=1 // pred_fallthru
      _
    // Predicated region
    $region42: #{tpu_custom_call.1} parent=1 // pred_check
      _
    $region43: #{tpu_custom_call.1} parent=1 // pred_check_branch
      %719 = sbr.rel (0) target = $region45
    $region44: #{tpu_custom_call.1} parent=1 // pred_region
      %720 = dma.done [#allocation9], 128
    $region45: #{tpu_custom_call.1} parent=1 // pred_fallthru
      _
    // Predicated region
    $region46: #{tpu_custom_call.1} parent=1 // pred_check
      _
    $region47: #{tpu_custom_call.1} parent=1 // pred_check_branch
      %722 = sbr.rel (0) target = $region49
    $region48: #{tpu_custom_call.1} parent=1 // pred_region
      %723 = dma.done [#allocation9], 128
    $region49: #{tpu_custom_call.1} parent=1 // pred_fallthru
      _
    %724 = vsyncpa [#allocation3], 1
    %725 = vsyncpa [#allocation6], 1
    %726 = vsyncpa [#allocation4], 1
    %727 = vsyncpa [#allocation9], 1

</llo_original>
